<compile_context>
chip_gen: v6e
topology: v6e:2x2x1
jax: 0.10.0
libtpu: 0.0.40
codegen_flags: <defaults>
</compile_context>

<pallas_src>
import jax
import jax.numpy as jnp
import numpy as np
from jax.experimental import pallas as pl
from jax.experimental.pallas import tpu as pltpu


# --------------------------------------------------------------------------------------
# Hardware / sizing helpers
# --------------------------------------------------------------------------------------
def _vmem_capacity_bytes():
    try:
        return int(pltpu.get_tpu_info().vmem_capacity_bytes)
    except Exception:
        try:
            kind = jax.devices()[0].device_kind.lower()
        except Exception:
            kind = ""
        if "v5" in kind or "v6" in kind:
            return 128 * 2**20
        return 64 * 2**20            # conservative default (v7x per-core budget)


def _default_fuse_taps():
    # Tap fusion (K*C-deep contraction) fills the 256-deep MXU of v6e/v7x; on v5e the
    # MXU is only 128-deep so per-tap matmuls are already full-depth there.
    try:
        return "v5" not in jax.devices()[0].device_kind.lower()
    except Exception:
        return True


def _vmem_bytes(shape, dtype):
    """Rough VMEM footprint of a buffer after (sublane, 128)-tile padding."""
    item = jnp.dtype(dtype).itemsize
    rows = int(np.prod(shape[:-1])) if len(shape) > 1 else 1
    cols = int(shape[-1])
    sub = max(8, 32 // item)                     # 8 sublanes f32, 16 bf16
    rows_p = -(-rows // sub) * sub
    cols_p = -(-cols // 128) * 128
    return rows_p * cols_p * item


# --------------------------------------------------------------------------------------
# Kernel
# --------------------------------------------------------------------------------------
def _make_tcn_kernel(*, K, D, P, Lp, L1, Lm, Lf, G, N1, N2,
                     Cin, Cmid, use_downsample, fuse1, fuse2):
    """Build the fused TCN-block kernel for one grid step of G packed batch elements.

    Packed layouts (channels-last, real channel widths, batch packed on sublanes):
      x_ref   : (G*Lp, Cin)  bf16, each element individually zero-padded by P rows
      w1_ref  : (K, Cin, Cout) or (K*Cin, Cout) bf16        (per-tap vs tap-fused)
      w2_ref  : (K, Cout, Cout) or (K*Cout, Cout) bf16
      b1/b2   : (1, Cout) f32
      wd_ref  : (Cin, Cout) bf16, bd_ref (1, Cout) f32      (only if use_downsample)
      out_ref : (G*Lf, Cout) bf16
      acc_ref : (max(N1, N2), Cout) f32  -- shared conv1/conv2 accumulator
      mid_ref : (G*Lm, Cout) bf16        -- zero-haloed conv2 input
      xcat/midcat : im2col lane-concat scratches (only when fused)
    """
    def kernel(x_ref, w1_ref, b1_ref, w2_ref, b2_ref, *rest):
        rest = list(rest)
        wd_ref = rest.pop(0) if use_downsample else None
        bd_ref = rest.pop(0) if use_downsample else None
        out_ref = rest.pop(0)
        acc_ref = rest.pop(0)
        mid_ref = rest.pop(0)
        xcat_ref = rest.pop(0) if fuse1 else None
        midcat_ref = rest.pop(0) if fuse2 else None

        Cout = out_ref.shape[-1]
        f32 = jnp.float32

        # ---- conv1 (+ bias fused into the first pass) over the whole packed row axis ----
        if fuse1:
            for k in range(K):   # im2col: lane-concat K dilated tap views (lane-aligned)
                xcat_ref[:, pl.ds(k * Cin, Cin)] = x_ref[pl.ds(k * D, N1), :]
            acc_ref[pl.ds(0, N1), :] = (
                jnp.dot(xcat_ref[...], w1_ref[...], preferred_element_type=f32)
                + b1_ref[...])
        else:
            acc_ref[pl.ds(0, N1), :] = (
                jnp.dot(x_ref[pl.ds(0, N1), :], w1_ref[0],
                        preferred_element_type=f32) + b1_ref[...])
            for k in range(1, K):
                acc_ref[pl.ds(0, N1), :] += jnp.dot(
                    x_ref[pl.ds(k * D, N1), :], w1_ref[k], preferred_element_type=f32)

        # ---- relu1 (+ dropout1 identity) -> zero-haloed conv2 input (cheap copies only;
        #      halo bands re-zeroed every step: safe under megacore grid sharding) ----
        for g in range(G):
            mb = g * Lm
            if P > 0:
                mid_ref[pl.ds(mb, P), :] = jnp.zeros((P, Cout), mid_ref.dtype)
                mid_ref[pl.ds(mb + P + L1, P), :] = jnp.zeros((P, Cout), mid_ref.dtype)
            mid_ref[pl.ds(mb + P, L1), :] = jnp.maximum(
                acc_ref[pl.ds(g * Lp, L1), :], 0.0).astype(mid_ref.dtype)

        # ---- conv2 (+ bias), accumulated in the SAME f32 scratch (not in out_ref) ----
        if fuse2:
            for k in range(K):
                midcat_ref[:, pl.ds(k * Cmid, Cmid)] = mid_ref[pl.ds(k * D, N2), :]
            acc_ref[pl.ds(0, N2), :] = (
                jnp.dot(midcat_ref[...], w2_ref[...], preferred_element_type=f32)
                + b2_ref[...])
        else:
            acc_ref[pl.ds(0, N2), :] = (
                jnp.dot(mid_ref[pl.ds(0, N2), :], w2_ref[0],
                        preferred_element_type=f32) + b2_ref[...])
            for k in range(1, K):
                acc_ref[pl.ds(0, N2), :] += jnp.dot(
                    mid_ref[pl.ds(k * D, N2), :], w2_ref[k], preferred_element_type=f32)

        # ---- relu2 (+ dropout2 identity), residual, trim, final ReLU: ONE output store ----
        for g in range(G):
            x_core = x_ref[pl.ds(g * Lp + P, Lf), :]       # un-padded input rows
            if use_downsample:
                res = jnp.dot(x_core, wd_ref[...],
                              preferred_element_type=f32) + bd_ref[...]
            else:
                res = x_core.astype(f32)                   # identity skip (bf16-rounded x)
            out2 = jnp.maximum(acc_ref[pl.ds(g * Lm, Lf), :], 0.0)
            out_ref[pl.ds(g * Lf, Lf), :] = jnp.maximum(out2 + res, 0.0).astype(out_ref.dtype)

    return kernel


# --------------------------------------------------------------------------------------
# Wrapper
# --------------------------------------------------------------------------------------
def tcn_single_block_pallas(x, params, *, kernel_size, stride, dilation, padding,
                            batch_tile=None, compute_dtype=jnp.bfloat16, fuse_taps=None):
    """x: (B, C_in, L) float32 (PyTorch NCL). Returns (B, C_out, L_final) in x.dtype."""
    assert stride == 1, "TODO(synk): stride != 1 not supported"
    B, Cin, L = (int(s) for s in x.shape)
    w1_pt, b1, w2_pt, b2, wd_pt, bd = params
    Cout = int(w1_pt.shape[0])
    K, D, P = int(kernel_size), int(dilation), int(padding)

    L1 = L + 2 * P - D * (K - 1)            # conv1 output length (per element)
    Lm = L1 + 2 * P                         # conv2 input length (zero-haloed)
    L2 = Lm - D * (K - 1)                   # conv2 output length
    assert L1 > 0 and L2 > 0, "conv output length must be positive"
    Lf = min(L2, L)                         # after PyTorch end-trim of the longer tensor
    Lp = L + 2 * P                          # padded input length per element

    use_downsample = (Cin != Cout)
    if fuse_taps is None:
        fuse_taps = _default_fuse_taps()
    fuse1 = bool(fuse_taps) and K > 1 and (Cin % 128 == 0)
    fuse2 = bool(fuse_taps) and K > 1 and (Cout % 128 == 0)

    vmem_cap = _vmem_capacity_bytes()
    rows_target = 4096 if vmem_cap >= 96 * 2**20 else 2048     # bigger tiles on v5e/v6e

    if batch_tile is None:
        G = max(1, min(B, 16, rows_target // max(Lp, 1)))
        if B >= 2:                          # keep >= 2 grid steps for v7x's 2 TensorCores
            G = min(G, -(-B // 2))
    else:
        G = max(1, int(batch_tile))
    nb = -(-B // G)
    Bp = nb * G

    N1 = G * Lp - D * (K - 1)               # packed conv1 output rows per grid step
    N2 = G * Lm - D * (K - 1)               # packed conv2 output rows per grid step
    A_rows = max(N1, N2)

    # ---- layout glue: channels-last, per-element zero halo, batch pack, bf16 cast ----
    x_cl = jnp.transpose(x, (0, 2, 1))                                   # (B, L, Cin)
    x_cl = jnp.pad(x_cl, ((0, Bp - B), (P, P), (0, 0)))                  # (Bp, Lp, Cin)
    x_pk = x_cl.reshape(nb, G * Lp, Cin).astype(compute_dtype)           # real Cin lanes

    w1 = jnp.transpose(w1_pt, (2, 1, 0)).astype(compute_dtype)           # (K, Cin, Cout)
    w2 = jnp.transpose(w2_pt, (2, 1, 0)).astype(compute_dtype)           # (K, Cout, Cout)
    if fuse1:
        w1 = w1.reshape(K * Cin, Cout)
    if fuse2:
        w2 = w2.reshape(K * Cout, Cout)
    b1r = jnp.asarray(b1, jnp.float32).reshape(1, Cout)
    b2r = jnp.asarray(b2, jnp.float32).reshape(1, Cout)

    w1_blk_idx = (0,) * w1.ndim
    w2_blk_idx = (0,) * w2.ndim
    in_arrays = [x_pk, w1, b1r, w2, b2r]
    in_specs = [
        pl.BlockSpec((None, G * Lp, Cin), lambda b: (b, 0, 0)),          # x (packed)
        pl.BlockSpec(tuple(w1.shape), lambda b: w1_blk_idx),             # w1
        pl.BlockSpec((1, Cout), lambda b: (0, 0)),                       # b1
        pl.BlockSpec(tuple(w2.shape), lambda b: w2_blk_idx),             # w2
        pl.BlockSpec((1, Cout), lambda b: (0, 0)),                       # b2
    ]
    if use_downsample:
        if wd_pt is None:
            wd_pt = jnp.zeros((Cout, Cin, 1), jnp.float32)
            bd = jnp.zeros((Cout,), jnp.float32)
        wd = jnp.transpose(wd_pt[:, :, 0], (1, 0)).astype(compute_dtype)  # (Cin, Cout)
        bdr = jnp.asarray(bd, jnp.float32).reshape(1, Cout)
        in_arrays += [wd, bdr]
        in_specs += [pl.BlockSpec((Cin, Cout), lambda b: (0, 0)),
                     pl.BlockSpec((1, Cout), lambda b: (0, 0))]

    scratch_shapes = [pltpu.VMEM((A_rows, Cout), jnp.float32),            # shared accumulator
                      pltpu.VMEM((G * Lm, Cout), compute_dtype)]          # zero-haloed conv2 in
    if fuse1:
        scratch_shapes.append(pltpu.VMEM((N1, K * Cin), compute_dtype))   # conv1 im2col
    if fuse2:
        scratch_shapes.append(pltpu.VMEM((N2, K * Cout), compute_dtype))  # conv2 im2col

    # ---- per-generation scoped-VMEM budget (85% of detected capacity as the ceiling) ----
    need = (2 * _vmem_bytes((G * Lp, Cin), compute_dtype)                 # x, double-buffered
            + 2 * _vmem_bytes((G * Lf, Cout), compute_dtype)              # out, double-buffered
            + 2 * _vmem_bytes(w1.shape, compute_dtype)
            + 2 * _vmem_bytes(w2.shape, compute_dtype)
            + 8 * _vmem_bytes((1, Cout), jnp.float32)
            + (2 * _vmem_bytes((Cin, Cout), compute_dtype) if use_downsample else 0)
            + _vmem_bytes((A_rows, Cout), jnp.float32)
            + _vmem_bytes((G * Lm, Cout), compute_dtype)
            + (_vmem_bytes((N1, K * Cin), compute_dtype) if fuse1 else 0)
            + (_vmem_bytes((N2, K * Cout), compute_dtype) if fuse2 else 0))
    vmem_limit = int(min(max(2 * need, 32 * 2**20), int(0.85 * vmem_cap)))
    # TODO(synk): length-tiling grid axis (halo = D*(K-1)+2*P) so very long sequences
    #             stay under v7x's 64 MiB VMEM instead of relying on G == 1.

    kernel = _make_tcn_kernel(K=K, D=D, P=P, Lp=Lp, L1=L1, Lm=Lm, Lf=Lf, G=G,
                              N1=N1, N2=N2, Cin=Cin, Cmid=Cout,
                              use_downsample=use_downsample, fuse1=fuse1, fuse2=fuse2)

    out_pk = pl.pallas_call(
        kernel,
        out_shape=jax.ShapeDtypeStruct((nb, G * Lf, Cout), compute_dtype),  # bf16 writeback
        grid=(nb,),
        in_specs=in_specs,
        out_specs=pl.BlockSpec((None, G * Lf, Cout), lambda b: (b, 0, 0)),
        scratch_shapes=scratch_shapes,
        compiler_params=pltpu.CompilerParams(
            dimension_semantics=("parallel",),
            vmem_limit_bytes=vmem_limit),
    )(*in_arrays)

    out = out_pk.reshape(Bp, Lf, Cout)[:B]                                # drop batch pad
    return jnp.transpose(out, (0, 2, 1)).astype(x.dtype)                  # (B, Cout, Lf)


# --------------------------------------------------------------------------------------
# Pure-JAX reference (for verification only)
# --------------------------------------------------------------------------------------
def _conv1d_ref(x, w, b, stride, dilation, padding):
    out = jax.lax.conv_general_dilated(
        x, w, window_strides=(stride,), padding=[(padding, padding)],
        rhs_dilation=(dilation,), dimension_numbers=("NCH", "OIH", "NCH"))
    return out + b[None, :, None]


def tcn_single_block_ref(x, params, *, kernel_size, stride, dilation, padding):
    w1, b1, w2, b2, wd, bd = params
    out = jnp.maximum(_conv1d_ref(x, w1, b1, stride, dilation, padding), 0.0)
    out = jnp.maximum(_conv1d_ref(out, w2, b2, stride, dilation, padding), 0.0)
    res = _conv1d_ref(x, wd, bd, 1, 1, 0) if x.shape[1] != w1.shape[0] else x
    lf = min(out.shape[2], res.shape[2])
    return jnp.maximum(out[:, :, :lf] + res[:, :, :lf], 0.0)


def _run_case(name, key, *, B, Cin, Cout, L, K, stride, dilation, padding, **pallas_kw):
    ks = jax.random.split(key, 7)
    s1 = 1.0 / np.sqrt(Cin * K)
    s2 = 1.0 / np.sqrt(Cout * K)
    sd = 1.0 / np.sqrt(Cin)
    x = jax.random.normal(ks[0], (B, Cin, L), dtype=jnp.float32)
    w1 = jax.random.uniform(ks[1], (Cout, Cin, K), jnp.float32, -s1, s1)
    b1 = jax.random.uniform(ks[2], (Cout,), jnp.float32, -s1, s1)
    w2 = jax.random.uniform(ks[3], (Cout, Cout, K), jnp.float32, -s2, s2)
    b2 = jax.random.uniform(ks[4], (Cout,), jnp.float32, -s2, s2)
    if Cin != Cout:
        wd = jax.random.uniform(ks[5], (Cout, Cin, 1), jnp.float32, -sd, sd)
        bd = jax.random.uniform(ks[6], (Cout,), jnp.float32, -sd, sd)
    else:
        wd, bd = None, None
    params = (w1, b1, w2, b2, wd, bd)

    out = tcn_single_block_pallas(x, params, kernel_size=K, stride=stride,
                                  dilation=dilation, padding=padding, **pallas_kw)
    out = jax.block_until_ready(out)

    # Reference on the same bf16-rounded inputs (bf16 is a wrapper policy); remaining
    # differences come only from bf16 intermediates + f32 accumulation order.
    cd = jnp.bfloat16
    r = lambda a: None if a is None else a.astype(cd).astype(jnp.float32)
    params_r = (r(w1), b1, r(w2), b2, r(wd), bd)
    ref = tcn_single_block_ref(r(x), params_r, kernel_size=K, stride=stride,
                               dilation=dilation, padding=padding)
    np.testing.assert_allclose(np.asarray(out), np.asarray(ref),
                               rtol=2e-2, atol=2e-2, err_msg=f"case {name}")


if __name__ == "__main__":
    root = jax.random.PRNGKey(0)
    k1, k2, k3 = jax.random.split(root, 3)
    # 1) Small channels + downsample residual (per-tap matmul path, real-4-lane x in HBM).
    _run_case("small", k1, B=2, Cin=4, Cout=8, L=16,
              K=3, stride=1, dilation=2, padding=3)
    # 2) Lane-aligned channels, identity residual, no downsample args passed;
    #    forces the tap-fused (K*C-deep) matmul path so it is exercised on any chip.
    _run_case("aligned", k2, B=2, Cin=128, Cout=128, L=16,
              K=3, stride=1, dilation=1, padding=1, fuse_taps=True)
    # 3) padding=0 -> conv output shorter than input (exercises the end-trim branch),
    #    odd batch (exercises batch padding + G=2 packing).
    _run_case("trim", k3, B=3, Cin=4, Cout=4, L=16,
              K=3, stride=1, dilation=2, padding=0)
    print("KERNEL_OK")
</pallas_src>

<mosaic_0001>
module attributes {stable_mosaic.version = 11 : i64} {
  func.func @kernel(%arg0: i32, %arg1: memref<1x22x4xbf16, #tpu.memory_space<vmem>>, %arg2: memref<3x4x8xbf16, #tpu.memory_space<vmem>>, %arg3: memref<1x8xf32, #tpu.memory_space<vmem>>, %arg4: memref<3x8x8xbf16, #tpu.memory_space<vmem>>, %arg5: memref<1x8xf32, #tpu.memory_space<vmem>>, %arg6: memref<4x8xbf16, #tpu.memory_space<vmem>>, %arg7: memref<1x8xf32, #tpu.memory_space<vmem>>, %arg8: memref<1x16x8xbf16, #tpu.memory_space<vmem>>, %arg9: memref<20x8xf32, #tpu.memory_space<vmem>>, %arg10: memref<24x8xbf16, #tpu.memory_space<vmem>>) attributes {dimension_semantics = [#tpu.dimension_semantics<parallel>], iteration_bounds = array<i64: 2>, scalar_prefetch = 0 : i64, scratch_operands = 2 : i64, tpu.core_type = #tpu.core_type<tc>, window_params = [{transform_indices = @transform_0, window_bounds = array<i64: 1, 22, 4>}, {pipeline_mode = #tpu.pipeline_mode<synchronous>, transform_indices = @transform_1, window_bounds = array<i64: 3, 4, 8>}, {pipeline_mode = #tpu.pipeline_mode<synchronous>, transform_indices = @transform_2, window_bounds = array<i64: 1, 8>}, {pipeline_mode = #tpu.pipeline_mode<synchronous>, transform_indices = @transform_3, window_bounds = array<i64: 3, 8, 8>}, {pipeline_mode = #tpu.pipeline_mode<synchronous>, transform_indices = @transform_4, window_bounds = array<i64: 1, 8>}, {pipeline_mode = #tpu.pipeline_mode<synchronous>, transform_indices = @transform_5, window_bounds = array<i64: 4, 8>}, {pipeline_mode = #tpu.pipeline_mode<synchronous>, transform_indices = @transform_6, window_bounds = array<i64: 1, 8>}, {transform_indices = @transform_7, window_bounds = array<i64: 1, 16, 8>}]} {
    %c0 = arith.constant 0 : index
    %c0_0 = arith.constant 0 : index
    %c0_1 = arith.constant 0 : index
    %0 = vector.load %arg1[%c0, %c0_0, %c0_1] : memref<1x22x4xbf16, #tpu.memory_space<vmem>>, vector<1x18x4xbf16>
    %1 = vector.shape_cast %0 : vector<1x18x4xbf16> to vector<18x4xbf16>
    %c0_2 = arith.constant 0 : index
    %c0_3 = arith.constant 0 : index
    %c0_4 = arith.constant 0 : index
    %2 = vector.load %arg2[%c0_2, %c0_3, %c0_4] : memref<3x4x8xbf16, #tpu.memory_space<vmem>>, vector<1x4x8xbf16>
    %3 = vector.shape_cast %2 : vector<1x4x8xbf16> to vector<4x8xbf16>
    %cst = arith.constant dense<0.000000e+00> : vector<18x8xf32>
    %4 = tpu.matmul %1, %3, %cst {dimension_numbers = #tpu.dot_dimension_numbers<[1], [0], [0], [1], [0, 0, 1, 1], [], []>} : vector<18x4xbf16>, vector<4x8xbf16>, vector<18x8xf32> -> vector<18x8xf32>
    %c0_5 = arith.constant 0 : index
    %c0_6 = arith.constant 0 : index
    %5 = vector.load %arg3[%c0_5, %c0_6] : memref<1x8xf32, #tpu.memory_space<vmem>>, vector<1x8xf32>
    %6 = vector.broadcast %5 : vector<1x8xf32> to vector<18x8xf32>
    %7 = arith.addf %4, %6 : vector<18x8xf32>
    %c0_7 = arith.constant 0 : index
    %c0_8 = arith.constant 0 : index
    %8 = vector.load %arg9[%c0_7, %c0_8] : memref<20x8xf32, #tpu.memory_space<vmem>>, vector<18x8xf32>
    tpu.vector_store %arg9[%c0_7, %c0_8], %7 {strides = array<i32>} : memref<20x8xf32, #tpu.memory_space<vmem>>, vector<18x8xf32>,
    %c0_9 = arith.constant 0 : index
    %c0_10 = arith.constant 0 : index
    %9 = vector.load %arg9[%c0_9, %c0_10] : memref<20x8xf32, #tpu.memory_space<vmem>>, vector<18x8xf32>
    %c0_11 = arith.constant 0 : index
    %c2 = arith.constant 2 : index
    %c0_12 = arith.constant 0 : index
    %10 = vector.load %arg1[%c0_11, %c2, %c0_12] : memref<1x22x4xbf16, #tpu.memory_space<vmem>>, vector<1x18x4xbf16>
    %11 = vector.shape_cast %10 : vector<1x18x4xbf16> to vector<18x4xbf16>
    %c1 = arith.constant 1 : index
    %c0_13 = arith.constant 0 : index
    %c0_14 = arith.constant 0 : index
    %12 = vector.load %arg2[%c1, %c0_13, %c0_14] : memref<3x4x8xbf16, #tpu.memory_space<vmem>>, vector<1x4x8xbf16>
    %13 = vector.shape_cast %12 : vector<1x4x8xbf16> to vector<4x8xbf16>
    %cst_15 = arith.constant dense<0.000000e+00> : vector<18x8xf32>
    %14 = tpu.matmul %11, %13, %cst_15 {dimension_numbers = #tpu.dot_dimension_numbers<[1], [0], [0], [1], [0, 0, 1, 1], [], []>} : vector<18x4xbf16>, vector<4x8xbf16>, vector<18x8xf32> -> vector<18x8xf32>
    %15 = arith.addf %9, %14 : vector<18x8xf32>
    %c0_16 = arith.constant 0 : index
    %c0_17 = arith.constant 0 : index
    %16 = vector.load %arg9[%c0_16, %c0_17] : memref<20x8xf32, #tpu.memory_space<vmem>>, vector<18x8xf32>
    tpu.vector_store %arg9[%c0_16, %c0_17], %15 {strides = array<i32>} : memref<20x8xf32, #tpu.memory_space<vmem>>, vector<18x8xf32>,
    %c0_18 = arith.constant 0 : index
    %c0_19 = arith.constant 0 : index
    %17 = vector.load %arg9[%c0_18, %c0_19] : memref<20x8xf32, #tpu.memory_space<vmem>>, vector<18x8xf32>
    %c0_20 = arith.constant 0 : index
    %c4 = arith.constant 4 : index
    %c0_21 = arith.constant 0 : index
    %18 = vector.load %arg1[%c0_20, %c4, %c0_21] : memref<1x22x4xbf16, #tpu.memory_space<vmem>>, vector<1x18x4xbf16>
    %19 = vector.shape_cast %18 : vector<1x18x4xbf16> to vector<18x4xbf16>
    %c2_22 = arith.constant 2 : index
    %c0_23 = arith.constant 0 : index
    %c0_24 = arith.constant 0 : index
    %20 = vector.load %arg2[%c2_22, %c0_23, %c0_24] : memref<3x4x8xbf16, #tpu.memory_space<vmem>>, vector<1x4x8xbf16>
    %21 = vector.shape_cast %20 : vector<1x4x8xbf16> to vector<4x8xbf16>
    %cst_25 = arith.constant dense<0.000000e+00> : vector<18x8xf32>
    %22 = tpu.matmul %19, %21, %cst_25 {dimension_numbers = #tpu.dot_dimension_numbers<[1], [0], [0], [1], [0, 0, 1, 1], [], []>} : vector<18x4xbf16>, vector<4x8xbf16>, vector<18x8xf32> -> vector<18x8xf32>
    %23 = arith.addf %17, %22 : vector<18x8xf32>
    %c0_26 = arith.constant 0 : index
    %c0_27 = arith.constant 0 : index
    %24 = vector.load %arg9[%c0_26, %c0_27] : memref<20x8xf32, #tpu.memory_space<vmem>>, vector<18x8xf32>
    tpu.vector_store %arg9[%c0_26, %c0_27], %23 {strides = array<i32>} : memref<20x8xf32, #tpu.memory_space<vmem>>, vector<18x8xf32>,
    %cst_28 = arith.constant 0.000000e+00 : bf16
    %25 = vector.broadcast %cst_28 : bf16 to vector<3x8xbf16>
    %c0_29 = arith.constant 0 : index
    %c0_30 = arith.constant 0 : index
    %26 = vector.load %arg10[%c0_29, %c0_30] : memref<24x8xbf16, #tpu.memory_space<vmem>>, vector<3x8xbf16>
    tpu.vector_store %arg10[%c0_29, %c0_30], %25 {strides = array<i32>} : memref<24x8xbf16, #tpu.memory_space<vmem>>, vector<3x8xbf16>,
    %cst_31 = arith.constant 0.000000e+00 : bf16
    %27 = vector.broadcast %cst_31 : bf16 to vector<3x8xbf16>
    %c21 = arith.constant 21 : index
    %c0_32 = arith.constant 0 : index
    %28 = vector.load %arg10[%c21, %c0_32] : memref<24x8xbf16, #tpu.memory_space<vmem>>, vector<3x8xbf16>
    tpu.vector_store %arg10[%c21, %c0_32], %27 {strides = array<i32>} : memref<24x8xbf16, #tpu.memory_space<vmem>>, vector<3x8xbf16>,
    %c0_33 = arith.constant 0 : index
    %c0_34 = arith.constant 0 : index
    %29 = vector.load %arg9[%c0_33, %c0_34] : memref<20x8xf32, #tpu.memory_space<vmem>>, vector<18x8xf32>
    %cst_35 = arith.constant 0.000000e+00 : f32
    %30 = vector.broadcast %cst_35 : f32 to vector<18x8xf32>
    %31 = arith.maximumf %29, %30 : vector<18x8xf32>
    %32 = arith.truncf %31 : vector<18x8xf32> to vector<18x8xbf16>
    %c3 = arith.constant 3 : index
    %c0_36 = arith.constant 0 : index
    %33 = vector.load %arg10[%c3, %c0_36] : memref<24x8xbf16, #tpu.memory_space<vmem>>, vector<18x8xbf16>
    tpu.vector_store %arg10[%c3, %c0_36], %32 {strides = array<i32>} : memref<24x8xbf16, #tpu.memory_space<vmem>>, vector<18x8xbf16>,
    %c0_37 = arith.constant 0 : index
    %c0_38 = arith.constant 0 : index
    %34 = vector.load %arg10[%c0_37, %c0_38] : memref<24x8xbf16, #tpu.memory_space<vmem>>, vector<20x8xbf16>
    %c0_39 = arith.constant 0 : index
    %c0_40 = arith.constant 0 : index
    %c0_41 = arith.constant 0 : index
    %35 = vector.load %arg4[%c0_39, %c0_40, %c0_41] : memref<3x8x8xbf16, #tpu.memory_space<vmem>>, vector<1x8x8xbf16>
    %36 = vector.shape_cast %35 : vector<1x8x8xbf16> to vector<8x8xbf16>
    %cst_42 = arith.constant dense<0.000000e+00> : vector<20x8xf32>
    %37 = tpu.matmul %34, %36, %cst_42 {dimension_numbers = #tpu.dot_dimension_numbers<[1], [0], [0], [1], [0, 0, 1, 1], [], []>} : vector<20x8xbf16>, vector<8x8xbf16>, vector<20x8xf32> -> vector<20x8xf32>
    %c0_43 = arith.constant 0 : index
    %c0_44 = arith.constant 0 : index
    %38 = vector.load %arg5[%c0_43, %c0_44] : memref<1x8xf32, #tpu.memory_space<vmem>>, vector<1x8xf32>
    %39 = vector.broadcast %38 : vector<1x8xf32> to vector<20x8xf32>
    %40 = arith.addf %37, %39 : vector<20x8xf32>
    %c0_45 = arith.constant 0 : index
    %c0_46 = arith.constant 0 : index
    %41 = vector.load %arg9[%c0_45, %c0_46] : memref<20x8xf32, #tpu.memory_space<vmem>>, vector<20x8xf32>
    tpu.vector_store %arg9[%c0_45, %c0_46], %40 {strides = array<i32>} : memref<20x8xf32, #tpu.memory_space<vmem>>, vector<20x8xf32>,
    %c0_47 = arith.constant 0 : index
    %c0_48 = arith.constant 0 : index
    %42 = vector.load %arg9[%c0_47, %c0_48] : memref<20x8xf32, #tpu.memory_space<vmem>>, vector<20x8xf32>
    %c2_49 = arith.constant 2 : index
    %c0_50 = arith.constant 0 : index
    %43 = vector.load %arg10[%c2_49, %c0_50] : memref<24x8xbf16, #tpu.memory_space<vmem>>, vector<20x8xbf16>
    %c1_51 = arith.constant 1 : index
    %c0_52 = arith.constant 0 : index
    %c0_53 = arith.constant 0 : index
    %44 = vector.load %arg4[%c1_51, %c0_52, %c0_53] : memref<3x8x8xbf16, #tpu.memory_space<vmem>>, vector<1x8x8xbf16>
    %45 = vector.shape_cast %44 : vector<1x8x8xbf16> to vector<8x8xbf16>
    %cst_54 = arith.constant dense<0.000000e+00> : vector<20x8xf32>
    %46 = tpu.matmul %43, %45, %cst_54 {dimension_numbers = #tpu.dot_dimension_numbers<[1], [0], [0], [1], [0, 0, 1, 1], [], []>} : vector<20x8xbf16>, vector<8x8xbf16>, vector<20x8xf32> -> vector<20x8xf32>
    %47 = arith.addf %42, %46 : vector<20x8xf32>
    %c0_55 = arith.constant 0 : index
    %c0_56 = arith.constant 0 : index
    %48 = vector.load %arg9[%c0_55, %c0_56] : memref<20x8xf32, #tpu.memory_space<vmem>>, vector<20x8xf32>
    tpu.vector_store %arg9[%c0_55, %c0_56], %47 {strides = array<i32>} : memref<20x8xf32, #tpu.memory_space<vmem>>, vector<20x8xf32>,
    %c0_57 = arith.constant 0 : index
    %c0_58 = arith.constant 0 : index
    %49 = vector.load %arg9[%c0_57, %c0_58] : memref<20x8xf32, #tpu.memory_space<vmem>>, vector<20x8xf32>
    %c4_59 = arith.constant 4 : index
    %c0_60 = arith.constant 0 : index
    %50 = vector.load %arg10[%c4_59, %c0_60] : memref<24x8xbf16, #tpu.memory_space<vmem>>, vector<20x8xbf16>
    %c2_61 = arith.constant 2 : index
    %c0_62 = arith.constant 0 : index
    %c0_63 = arith.constant 0 : index
    %51 = vector.load %arg4[%c2_61, %c0_62, %c0_63] : memref<3x8x8xbf16, #tpu.memory_space<vmem>>, vector<1x8x8xbf16>
    %52 = vector.shape_cast %51 : vector<1x8x8xbf16> to vector<8x8xbf16>
    %cst_64 = arith.constant dense<0.000000e+00> : vector<20x8xf32>
    %53 = tpu.matmul %50, %52, %cst_64 {dimension_numbers = #tpu.dot_dimension_numbers<[1], [0], [0], [1], [0, 0, 1, 1], [], []>} : vector<20x8xbf16>, vector<8x8xbf16>, vector<20x8xf32> -> vector<20x8xf32>
    %54 = arith.addf %49, %53 : vector<20x8xf32>
    %c0_65 = arith.constant 0 : index
    %c0_66 = arith.constant 0 : index
    %55 = vector.load %arg9[%c0_65, %c0_66] : memref<20x8xf32, #tpu.memory_space<vmem>>, vector<20x8xf32>
    tpu.vector_store %arg9[%c0_65, %c0_66], %54 {strides = array<i32>} : memref<20x8xf32, #tpu.memory_space<vmem>>, vector<20x8xf32>,
    %c0_67 = arith.constant 0 : index
    %c3_68 = arith.constant 3 : index
    %c0_69 = arith.constant 0 : index
    %56 = vector.load %arg1[%c0_67, %c3_68, %c0_69] : memref<1x22x4xbf16, #tpu.memory_space<vmem>>, vector<1x16x4xbf16>
    %57 = vector.shape_cast %56 : vector<1x16x4xbf16> to vector<16x4xbf16>
    %c0_70 = arith.constant 0 : index
    %c0_71 = arith.constant 0 : index
    %58 = vector.load %arg6[%c0_70, %c0_71] : memref<4x8xbf16, #tpu.memory_space<vmem>>, vector<4x8xbf16>
    %cst_72 = arith.constant dense<0.000000e+00> : vector<16x8xf32>
    %59 = tpu.matmul %57, %58, %cst_72 {dimension_numbers = #tpu.dot_dimension_numbers<[1], [0], [0], [1], [0, 0, 1, 1], [], []>} : vector<16x4xbf16>, vector<4x8xbf16>, vector<16x8xf32> -> vector<16x8xf32>
    %c0_73 = arith.constant 0 : index
    %c0_74 = arith.constant 0 : index
    %60 = vector.load %arg7[%c0_73, %c0_74] : memref<1x8xf32, #tpu.memory_space<vmem>>, vector<1x8xf32>
    %61 = vector.broadcast %60 : vector<1x8xf32> to vector<16x8xf32>
    %62 = arith.addf %59, %61 : vector<16x8xf32>
    %c0_75 = arith.constant 0 : index
    %c0_76 = arith.constant 0 : index
    %63 = vector.load %arg9[%c0_75, %c0_76] : memref<20x8xf32, #tpu.memory_space<vmem>>, vector<16x8xf32>
    %cst_77 = arith.constant 0.000000e+00 : f32
    %64 = vector.broadcast %cst_77 : f32 to vector<16x8xf32>
    %65 = arith.maximumf %63, %64 : vector<16x8xf32>
    %66 = arith.addf %65, %62 : vector<16x8xf32>
    %cst_78 = arith.constant 0.000000e+00 : f32
    %67 = vector.broadcast %cst_78 : f32 to vector<16x8xf32>
    %68 = arith.maximumf %66, %67 : vector<16x8xf32>
    %69 = arith.truncf %68 : vector<16x8xf32> to vector<16x8xbf16>
    %c0_79 = arith.constant 0 : index
    %c0_80 = arith.constant 0 : index
    %c0_81 = arith.constant 0 : index
    %70 = vector.load %arg8[%c0_79, %c0_80, %c0_81] : memref<1x16x8xbf16, #tpu.memory_space<vmem>>, vector<1x16x8xbf16>
    %71 = vector.shape_cast %70 : vector<1x16x8xbf16> to vector<16x8xbf16>
    %72 = vector.shape_cast %69 : vector<16x8xbf16> to vector<1x16x8xbf16>
    tpu.vector_store %arg8[%c0_79, %c0_80, %c0_81], %72 {strides = array<i32>} : memref<1x16x8xbf16, #tpu.memory_space<vmem>>, vector<1x16x8xbf16>,
    return
  }
  func.func @transform_0(%arg0: i32) -> (i32, i32, i32) {
    %c0_i32 = arith.constant 0 : i32
    %c0_i32_0 = arith.constant 0 : i32
    %c0_i32_1 = arith.constant 0 : i32
    return %arg0, %c0_i32, %c0_i32_0 : i32, i32, i32
  }
  func.func @transform_1(%arg0: i32) -> (i32, i32, i32) {
    %c0_i32 = arith.constant 0 : i32
    %c0_i32_0 = arith.constant 0 : i32
    %c0_i32_1 = arith.constant 0 : i32
    %c0_i32_2 = arith.constant 0 : i32
    return %c0_i32, %c0_i32_0, %c0_i32_1 : i32, i32, i32
  }
  func.func @transform_2(%arg0: i32) -> (i32, i32) {
    %c0_i32 = arith.constant 0 : i32
    %c0_i32_0 = arith.constant 0 : i32
    %c0_i32_1 = arith.constant 0 : i32
    return %c0_i32, %c0_i32_0 : i32, i32
  }
  func.func @transform_3(%arg0: i32) -> (i32, i32, i32) {
    %c0_i32 = arith.constant 0 : i32
    %c0_i32_0 = arith.constant 0 : i32
    %c0_i32_1 = arith.constant 0 : i32
    %c0_i32_2 = arith.constant 0 : i32
    return %c0_i32, %c0_i32_0, %c0_i32_1 : i32, i32, i32
  }
  func.func @transform_4(%arg0: i32) -> (i32, i32) {
    %c0_i32 = arith.constant 0 : i32
    %c0_i32_0 = arith.constant 0 : i32
    %c0_i32_1 = arith.constant 0 : i32
    return %c0_i32, %c0_i32_0 : i32, i32
  }
  func.func @transform_5(%arg0: i32) -> (i32, i32) {
    %c0_i32 = arith.constant 0 : i32
    %c0_i32_0 = arith.constant 0 : i32
    %c0_i32_1 = arith.constant 0 : i32
    return %c0_i32, %c0_i32_0 : i32, i32
  }
  func.func @transform_6(%arg0: i32) -> (i32, i32) {
    %c0_i32 = arith.constant 0 : i32
    %c0_i32_0 = arith.constant 0 : i32
    %c0_i32_1 = arith.constant 0 : i32
    return %c0_i32, %c0_i32_0 : i32, i32
  }
  func.func @transform_7(%arg0: i32) -> (i32, i32, i32) {
    %c0_i32 = arith.constant 0 : i32
    %c0_i32_0 = arith.constant 0 : i32
    %c0_i32_1 = arith.constant 0 : i32
    return %arg0, %c0_i32, %c0_i32_0 : i32, i32, i32
  }
}

</mosaic_0001>

<llo_original>
// kernel: tpu_custom_call.1
$region0: #{tpu_custom_call.1}
  #allocation0 [shape = 'u32[]', space=smem, size = 0x4, offset = 0x4, fixed_abs, tag = 'smem constant byte address 0x4 - core index']
  #allocation1 [shape = 'u32[144,128]{1,0:T(1,128)}', space=vmem, size = 0x12000, scoped, tag = 'internal scratch']
  #allocation2 [shape = 'f32[20,8]{1,0:T(8,128)}', space=vmem, size = 0x3000, scoped, tag = 'scratch operand']
  #allocation3 [shape = 'bf16[24,8]{1,0:T(8,128)(2,1)}', space=vmem, size = 0x1800, scoped, tag = 'scratch operand']
  %s0 = inlined_call_operand.vmem [shape: bf16[2,22,4], index: 0, kind: input, shape index: {}]
  %s1 = inlined_call_operand.vmem [shape: bf16[3,4,8], index: 1, kind: input, shape index: {}]
  %s2 = inlined_call_operand.vmem [shape: f32[1,8], index: 2, kind: input, shape index: {}]
  %s3 = inlined_call_operand.vmem [shape: bf16[3,8,8], index: 3, kind: input, shape index: {}]
  %s4 = inlined_call_operand.vmem [shape: f32[1,8], index: 4, kind: input, shape index: {}]
  %s5 = inlined_call_operand.vmem [shape: bf16[4,8], index: 5, kind: input, shape index: {}]
  %s6 = inlined_call_operand.vmem [shape: f32[1,8], index: 6, kind: input, shape index: {}]
  %s7 = inlined_call_operand.vmem [shape: bf16[2,16,8], index: 7, kind: output, shape index: {}]
  %s8 = sld [smem:[#allocation0]]
  $region61: #{tpu_custom_call.1} parent=0
    _
  %s10 = ssub.s32 1, %s8
  %s11 = scalar_select 0, %s10, %s8
  loop: start=0, step=1, limit=4
  $region2: #{tpu_custom_call.1} parent=0 // loop_pre_header
    _
  $region3: #{tpu_custom_call.1} parent=0 // loop_header
    %s13 = sphi 0, %s17
    %p14 = scmp.ge.s32.totalorder %s13, 4
    %s23 = sphi 0, %s25
    %s26 = sphi 0, %s23
    %s27 = sphi 0, %s26
    %s43 = sphi 0, %s27
    %s47 = sphi 0, %s47
    %s49 = sphi 0, %s47
    %s50 = sphi 0, %s49
    %s64 = sphi 0, %s50
    %s68 = sphi 0, %s68
    %s70 = sphi 0, %s68
    %s71 = sphi 0, %s70
    %s85 = sphi 0, %s71
    %s89 = sphi 0, %s89
    %s91 = sphi 0, %s89
    %s92 = sphi 0, %s91
    %s106 = sphi 0, %s92
    %s110 = sphi 0, %s110
    %s112 = sphi 0, %s110
    %s113 = sphi 0, %s112
    %s127 = sphi 0, %s113
    %s131 = sphi 0, %s131
    %s133 = sphi 0, %s131
    %s134 = sphi 0, %s133
    %s148 = sphi 0, %s134
    %s152 = sphi 0, %s152
    %s154 = sphi 0, %s152
    %s155 = sphi 0, %s154
    %s169 = sphi 0, %s155
    %s175 = sphi 0, %s177
    %s178 = sphi 0, %s175
    %s179 = sphi 0, %s178
    %s195 = sphi 0, %s179
  $region4: #{tpu_custom_call.1} parent=0 // loop_header_branch
    %16 = sbr.rel (%p14) target = $region8
  $region5: #{tpu_custom_call.1} parent=0 // loop_body
    %s18 = ssub.s32 %s13, 1
    %s19 = ssub.s32 %s13, 2
    %s20 = sadd.s32 %s13, 1
    %s21 = ssub.s32 %s13, %s20
    %p22 = scmp.eq.s32.totalorder %s21, 0
    %s24 = sadd.s32 %s23, 1
    %s25 = scalar_select %p22, %s23, %s24
    %p28 = pneg %p22
    %p29 = scmp.eq.s32.totalorder %s13, 1
    %p30 = por %p28, %p29
    %p31 = scmp.ne.s32.totalorder %s23, %s26
    %p32 = scmp.eq.s32.totalorder %s13, 0
    %p33 = por %p31, %p32
    %p34 = scmp.ne.s32.totalorder %s23, %s26
    %p35 = scmp.eq.s32.totalorder %s18, 1
    %p36 = por %p34, %p35
    %p37 = scmp.ne.s32.totalorder %s26, %s27
    %p38 = scmp.eq.s32.totalorder %s18, 0
    %p39 = por %p37, %p38
    %p40 = scmp.ne.s32.totalorder %s26, %s27
    %p41 = scmp.eq.s32.totalorder %s19, 1
    %p42 = por %p40, %p41
    %p44 = scmp.ne.s32.totalorder %s27, %s43
    %p45 = scmp.eq.s32.totalorder %s19, 0
    %p46 = por %p44, %p45
    %s48 = sadd.s32 %s47, 1
    %p51 = scmp.eq.s32.totalorder %s13, 1
    %p52 = scmp.ne.s32.totalorder %s47, %s49
    %p53 = scmp.eq.s32.totalorder %s13, 0
    %p54 = por %p52, %p53
    %p55 = scmp.ne.s32.totalorder %s47, %s49
    %p56 = scmp.eq.s32.totalorder %s18, 1
    %p57 = por %p55, %p56
    %p58 = scmp.ne.s32.totalorder %s49, %s50
    %p59 = scmp.eq.s32.totalorder %s18, 0
    %p60 = por %p58, %p59
    %p61 = scmp.ne.s32.totalorder %s49, %s50
    %p62 = scmp.eq.s32.totalorder %s19, 1
    %p63 = por %p61, %p62
    %p65 = scmp.ne.s32.totalorder %s50, %s64
    %p66 = scmp.eq.s32.totalorder %s19, 0
    %p67 = por %p65, %p66
    %s69 = sadd.s32 %s68, 1
    %p72 = scmp.eq.s32.totalorder %s13, 1
    %p73 = scmp.ne.s32.totalorder %s68, %s70
    %p74 = scmp.eq.s32.totalorder %s13, 0
    %p75 = por %p73, %p74
    %p76 = scmp.ne.s32.totalorder %s68, %s70
    %p77 = scmp.eq.s32.totalorder %s18, 1
    %p78 = por %p76, %p77
    %p79 = scmp.ne.s32.totalorder %s70, %s71
    %p80 = scmp.eq.s32.totalorder %s18, 0
    %p81 = por %p79, %p80
    %p82 = scmp.ne.s32.totalorder %s70, %s71
    %p83 = scmp.eq.s32.totalorder %s19, 1
    %p84 = por %p82, %p83
    %p86 = scmp.ne.s32.totalorder %s71, %s85
    %p87 = scmp.eq.s32.totalorder %s19, 0
    %p88 = por %p86, %p87
    %s90 = sadd.s32 %s89, 1
    %p93 = scmp.eq.s32.totalorder %s13, 1
    %p94 = scmp.ne.s32.totalorder %s89, %s91
    %p95 = scmp.eq.s32.totalorder %s13, 0
    %p96 = por %p94, %p95
    %p97 = scmp.ne.s32.totalorder %s89, %s91
    %p98 = scmp.eq.s32.totalorder %s18, 1
    %p99 = por %p97, %p98
    %p100 = scmp.ne.s32.totalorder %s91, %s92
    %p101 = scmp.eq.s32.totalorder %s18, 0
    %p102 = por %p100, %p101
    %p103 = scmp.ne.s32.totalorder %s91, %s92
    %p104 = scmp.eq.s32.totalorder %s19, 1
    %p105 = por %p103, %p104
    %p107 = scmp.ne.s32.totalorder %s92, %s106
    %p108 = scmp.eq.s32.totalorder %s19, 0
    %p109 = por %p107, %p108
    %s111 = sadd.s32 %s110, 1
    %p114 = scmp.eq.s32.totalorder %s13, 1
    %p115 = scmp.ne.s32.totalorder %s110, %s112
    %p116 = scmp.eq.s32.totalorder %s13, 0
    %p117 = por %p115, %p116
    %p118 = scmp.ne.s32.totalorder %s110, %s112
    %p119 = scmp.eq.s32.totalorder %s18, 1
    %p120 = por %p118, %p119
    %p121 = scmp.ne.s32.totalorder %s112, %s113
    %p122 = scmp.eq.s32.totalorder %s18, 0
    %p123 = por %p121, %p122
    %p124 = scmp.ne.s32.totalorder %s112, %s113
    %p125 = scmp.eq.s32.totalorder %s19, 1
    %p126 = por %p124, %p125
    %p128 = scmp.ne.s32.totalorder %s113, %s127
    %p129 = scmp.eq.s32.totalorder %s19, 0
    %p130 = por %p128, %p129
    %s132 = sadd.s32 %s131, 1
    %p135 = scmp.eq.s32.totalorder %s13, 1
    %p136 = scmp.ne.s32.totalorder %s131, %s133
    %p137 = scmp.eq.s32.totalorder %s13, 0
    %p138 = por %p136, %p137
    %p139 = scmp.ne.s32.totalorder %s131, %s133
    %p140 = scmp.eq.s32.totalorder %s18, 1
    %p141 = por %p139, %p140
    %p142 = scmp.ne.s32.totalorder %s133, %s134
    %p143 = scmp.eq.s32.totalorder %s18, 0
    %p144 = por %p142, %p143
    %p145 = scmp.ne.s32.totalorder %s133, %s134
    %p146 = scmp.eq.s32.totalorder %s19, 1
    %p147 = por %p145, %p146
    %p149 = scmp.ne.s32.totalorder %s134, %s148
    %p150 = scmp.eq.s32.totalorder %s19, 0
    %p151 = por %p149, %p150
    %s153 = sadd.s32 %s152, 1
    %p156 = scmp.eq.s32.totalorder %s13, 1
    %p157 = scmp.ne.s32.totalorder %s152, %s154
    %p158 = scmp.eq.s32.totalorder %s13, 0
    %p159 = por %p157, %p158
    %p160 = scmp.ne.s32.totalorder %s152, %s154
    %p161 = scmp.eq.s32.totalorder %s18, 1
    %p162 = por %p160, %p161
    %p163 = scmp.ne.s32.totalorder %s154, %s155
    %p164 = scmp.eq.s32.totalorder %s18, 0
    %p165 = por %p163, %p164
    %p166 = scmp.ne.s32.totalorder %s154, %s155
    %p167 = scmp.eq.s32.totalorder %s19, 1
    %p168 = por %p166, %p167
    %p170 = scmp.ne.s32.totalorder %s155, %s169
    %p171 = scmp.eq.s32.totalorder %s19, 0
    %p172 = por %p170, %p171
    %s173 = ssub.s32 %s13, %s20
    %p174 = scmp.eq.s32.totalorder %s173, 0
    %s176 = sadd.s32 %s175, 1
    %s177 = scalar_select %p174, %s175, %s176
    %p180 = pneg %p174
    %p181 = scmp.eq.s32.totalorder %s13, 1
    %p182 = por %p180, %p181
    %p183 = scmp.ne.s32.totalorder %s175, %s178
    %p184 = scmp.eq.s32.totalorder %s13, 0
    %p185 = por %p183, %p184
    %p186 = scmp.ne.s32.totalorder %s175, %s178
    %p187 = scmp.eq.s32.totalorder %s18, 1
    %p188 = por %p186, %p187
    %p189 = scmp.ne.s32.totalorder %s178, %s179
    %p190 = scmp.eq.s32.totalorder %s18, 0
    %p191 = por %p189, %p190
    %p192 = scmp.ne.s32.totalorder %s178, %s179
    %p193 = scmp.eq.s32.totalorder %s19, 1
    %p194 = por %p192, %p193
    %p196 = scmp.ne.s32.totalorder %s179, %s195
    %p197 = scmp.eq.s32.totalorder %s19, 0
    %p198 = por %p196, %p197
    %p199 = scmp.le.s32.totalorder 1, %s13
    %p200 = scmp.lt.s32.totalorder %s13, 3
    %p201 = pnand %p199, %p200
    %p202 = pneg %p201
    // Predicated region
    $region9: #{tpu_custom_call.1} parent=5 // pred_check
      _
    $region10: #{tpu_custom_call.1} parent=5 // pred_check_branch
      %204 = sbr.rel (%p201) target = $region12
    $region11: #{tpu_custom_call.1} parent=5 // pred_region
      %s205 = ssub.s32 %s13, 1
      // Predicated region
      $region13: #{tpu_custom_call.1} parent=11 // pred_check
        %p206 = pneg %p60
      $region14: #{tpu_custom_call.1} parent=11 // pred_check_branch
        %208 = sbr.rel (%p206) target = $region16
      $region15: #{tpu_custom_call.1} parent=11 // pred_region
        _
      $region16: #{tpu_custom_call.1} parent=11 // pred_fallthru
        _
      // Predicated region
      $region17: #{tpu_custom_call.1} parent=11 // pred_check
        %p209 = pneg %p81
      $region18: #{tpu_custom_call.1} parent=11 // pred_check_branch
        %211 = sbr.rel (%p209) target = $region20
      $region19: #{tpu_custom_call.1} parent=11 // pred_region
        _
      $region20: #{tpu_custom_call.1} parent=11 // pred_fallthru
        _
      // Predicated region
      $region21: #{tpu_custom_call.1} parent=11 // pred_check
        %p212 = pneg %p102
      $region22: #{tpu_custom_call.1} parent=11 // pred_check_branch
        %214 = sbr.rel (%p212) target = $region24
      $region23: #{tpu_custom_call.1} parent=11 // pred_region
        _
      $region24: #{tpu_custom_call.1} parent=11 // pred_fallthru
        _
      // Predicated region
      $region25: #{tpu_custom_call.1} parent=11 // pred_check
        %p215 = pneg %p123
      $region26: #{tpu_custom_call.1} parent=11 // pred_check_branch
        %217 = sbr.rel (%p215) target = $region28
      $region27: #{tpu_custom_call.1} parent=11 // pred_region
        _
      $region28: #{tpu_custom_call.1} parent=11 // pred_fallthru
        _
      // Predicated region
      $region29: #{tpu_custom_call.1} parent=11 // pred_check
        %p218 = pneg %p144
      $region30: #{tpu_custom_call.1} parent=11 // pred_check_branch
        %220 = sbr.rel (%p218) target = $region32
      $region31: #{tpu_custom_call.1} parent=11 // pred_region
        _
      $region32: #{tpu_custom_call.1} parent=11 // pred_fallthru
        _
      // Predicated region
      $region33: #{tpu_custom_call.1} parent=11 // pred_check
        %p221 = pneg %p165
      $region34: #{tpu_custom_call.1} parent=11 // pred_check_branch
        %223 = sbr.rel (%p221) target = $region36
      $region35: #{tpu_custom_call.1} parent=11 // pred_region
        _
      $region36: #{tpu_custom_call.1} parent=11 // pred_fallthru
        _
    $region12: #{tpu_custom_call.1} parent=5 // pred_fallthru
      _
    %p224 = scmp.lt.s32.totalorder %s13, 2
    // Predicated region
    $region37: #{tpu_custom_call.1} parent=5 // pred_check
      %p225 = pneg %p224
    $region38: #{tpu_custom_call.1} parent=5 // pred_check_branch
      %227 = sbr.rel (%p225) target = $region40
    $region39: #{tpu_custom_call.1} parent=5 // pred_region
      // Predicated region
      $region41: #{tpu_custom_call.1} parent=39 // pred_check
        %p228 = pneg %p33
      $region42: #{tpu_custom_call.1} parent=39 // pred_check_branch
        %230 = sbr.rel (%p228) target = $region44
      $region43: #{tpu_custom_call.1} parent=39 // pred_region
        %p231 = scmp.lt.s32.totalorder %s13, 1
        %s232 = scalar_select %p231, %s13, 1
        %s233 = smul.addr %s232, 3
        %s234 = smul.addr %s233, 4
        %s235 = scalar_lea.vmem %s0, %s234
      $region44: #{tpu_custom_call.1} parent=39 // pred_fallthru
        _
    $region40: #{tpu_custom_call.1} parent=5 // pred_fallthru
      _
    %p236 = scmp.le.s32.totalorder 1, %s13
    %p237 = scmp.lt.s32.totalorder %s13, 3
    %p238 = pnand %p236, %p237
    %p239 = pneg %p238
    // Predicated region
    $region45: #{tpu_custom_call.1} parent=5 // pred_check
      _
    $region46: #{tpu_custom_call.1} parent=5 // pred_check_branch
      %241 = sbr.rel (%p238) target = $region48
    $region47: #{tpu_custom_call.1} parent=5 // pred_region
      %s242 = ssub.s32 %s13, 1
      %p243 = scmp.lt.s32.totalorder %s18, 1
      %s244 = scalar_select %p243, %s18, 1
      %s245 = smul.addr %s244, 3
      %s246 = smul.addr %s245, 4
      %s247 = scalar_lea.vmem %s0, %s246
      %p248 = pneg %p39
      %p249 = pneg %p36
      %p250 = pneg %p60
      %p251 = pneg %p57
      %p252 = pneg %p81
      %p253 = pneg %p78
      %p254 = pneg %p102
      %p255 = pneg %p99
      %p256 = pneg %p123
      %p257 = pneg %p120
      %p258 = pneg %p144
      %p259 = pneg %p141
      %p260 = pneg %p165
      %p261 = pneg %p162
      %p262 = pneg %p191
      %p263 = pneg %p188
      %p264 = scmp.lt.s32.totalorder %s18, 1
      %s265 = scalar_select %p264, %s18, 1
      %s266 = smul.addr %s265, 2
      %s267 = smul.addr %s266, 4
      %s268 = scalar_lea.vmem %s7, %s267
      %p269 = scmp.lt.s32.totalorder %s18, 1
      %s270 = scalar_select %p269, %s18, 1
      %s271 = smul.addr %s270, 3
      %s272 = smul.addr %s271, 4
      %s273 = scalar_lea.vmem %s0, %s272
      %p274 = scmp.lt.s32.totalorder %s18, 1
      %s275 = scalar_select %p274, %s18, 1
      %s276 = smul.addr %s275, 2
      %s277 = smul.addr %s276, 4
      %s278 = scalar_lea.vmem %s7, %s277
      %v280 = vld [vmem:[%s273] sm:$0xf]
      %v281 = vld [vmem:[%s273 + $0x4] sm:$0xf]
      %v282 = vld [vmem:[%s273 + $0x8] sm:$0x1]
      %v283 = vld [vmem:[%s1] sm:$0x3]
      %v284 = vld [vmem:[%s2] sm:$0x1]
      %v286 = vlaneseq
      %v287 = vshrl.u32 %v286, 7
      %v288 = vsub.s32 0, %v287
      %v289 = vrot.slane %v284, %v288
      %v294 = vunpack.c.l.b16 %v280
      %v295 = vunpack.c.l.b16 %v281
      %v296 = vunpack.c.l.b16 %v282
      %v297 = vpack.c.b16 %v295, %v294
      %v298 = vpack.c.b16 %v296, %v296
      %vm299 = vcmask 31744
      %v301 = vsel %vm299, %v297, 0
      %v304 = vsel %vm299, %v298, 0
      %vm306 = vcmask 1041408
      %v308 = vsel %vm306, %v283, 0
      %310 = vmatprep.subr.bf16.mxu0 0
      %311 = vmatpush1.bf16.msra.mxu0 0
      %312 = vmatprep.subr.bf16.mxu0 0
      %313 = vmatpush1.bf16.msra.mxu0 0
      %314 = vmatprep.subr.bf16.mxu0 0
      %315 = vmatpush1.bf16.msra.mxu0 0
      %316 = vmatprep.subr.bf16.mxu0 0
      %317 = vmatpush1.bf16.msra.mxu0 0
      %318 = vmatprep.subr.bf16.mxu0 0
      %319 = vmatpush1.bf16.msra.mxu0 0
      %320 = vmatprep.subr.bf16.mxu0 0
      %321 = vmatpush1.bf16.msra.mxu0 0
      %322 = vmatprep.subr.bf16.mxu0 0
      %323 = vmatpush1.bf16.msra.mxu0 0
      %324 = vmatprep.subr.bf16.mxu0 0
      %325 = vmatpush1.bf16.msra.mxu0 %v308
      %326 = vmatprep.subr.bf16.mxu0 0
      %327 = vmatpush2.bf16.msra.mxu0 0
      %328 = vmatprep.subr.bf16.mxu0 0
      %329 = vmatpush2.bf16.msra.mxu0 0
      %330 = vmatprep.subr.bf16.mxu0 0
      %331 = vmatpush2.bf16.msra.mxu0 0
      %332 = vmatprep.subr.bf16.mxu0 0
      %333 = vmatpush2.bf16.msra.mxu0 0
      %334 = vmatprep.subr.bf16.mxu0 0
      %335 = vmatpush2.bf16.msra.mxu0 0
      %336 = vmatprep.subr.bf16.mxu0 0
      %337 = vmatpush2.bf16.msra.mxu0 0
      %338 = vmatprep.subr.bf16.mxu0 0
      %339 = vmatpush2.bf16.msra.mxu0 0
      %340 = vmatprep.subr.bf16.mxu0 0
      %341 = vmatpush2.bf16.msra.mxu0 0
      %342 = vmatprep.mubr.bf16.mxu0 0
      %343 = vmatmul.mubr.bf16.gmra.mxu0 %v301
      %v344 = vpop.f32.mrf.mxu0
      %v345 = vadd.f32 %v289, %v344
      %v346 = vpop.f32.mrf.mxu0
      %v347 = vpop.f32.mrf.mxu0
      %v348 = vadd.f32 %v289, %v347
      %v349 = vpop.f32.mrf.mxu0
      %350 = vmatprep.mubr.bf16.mxu0 0
      %351 = vmatmul.mubr.bf16.gmra.mxu0 %v304
      %v352 = vpop.f32.mrf.mxu0
      %v353 = vadd.f32 %v289, %v352
      %v354 = vpop.f32.mrf.mxu0
      %v355 = vpop.f32.mrf.mxu0
      %v356 = vpop.f32.mrf.mxu0
      %357 = vdwg.mxu0
      %vm358 = vcmask 64512
      %359 = vst.msk [vmem:[#allocation2] sm:$0xff] %vm358, %v345
      %360 = vst.msk [vmem:[#allocation2 + $0x8] sm:$0xff] %vm358, %v348
      %vm361 = vcmask 58368
      %362 = vst.msk [vmem:[#allocation2 + $0x10] sm:$0x3] %vm361, %v353
      %v363 = vld [vmem:[#allocation2] sm:$0xff]
      %v364 = vld [vmem:[#allocation2 + $0x8] sm:$0xff]
      %v365 = vld [vmem:[#allocation2 + $0x10] sm:$0x3]
      %v366 = vld [vmem:[%s273] sm:$0xe]
      %v367 = vld [vmem:[%s273 + $0x4] sm:$0xf]
      %v368 = vld [vmem:[%s273 + $0x8] sm:$0x3]
      %s369 = scalar_lea.vmem %s1, 2
      %v370 = vld [vmem:[%s369] sm:$0x3]
      %v374 = vunpack.c.l.b16 %v366
      %v375 = vunpack.c.l.b16 %v367
      %v376 = vunpack.c.l.b16 %v368
      %v377 = vpack.c.b16 %v375, %v374
      %v378 = vpack.c.b16 %v376, %v376
      %vm379 = vcmask 1046528
      %v380 = vrot.slane %v377, 1
      %v381 = vrot.slane %v378, 1
      %v382 = vsel %vm379, %v380, %v381
      %v384 = vsel %vm299, %v382, 0
      %v387 = vsel %vm299, %v381, 0
      %v390 = vsel %vm306, %v370, 0
      %392 = vmatprep.subr.bf16.mxu0 0
      %393 = vmatpush1.bf16.msra.mxu0 0
      %394 = vmatprep.subr.bf16.mxu0 0
      %395 = vmatpush1.bf16.msra.mxu0 0
      %396 = vmatprep.subr.bf16.mxu0 0
      %397 = vmatpush1.bf16.msra.mxu0 0
      %398 = vmatprep.subr.bf16.mxu0 0
      %399 = vmatpush1.bf16.msra.mxu0 0
      %400 = vmatprep.subr.bf16.mxu0 0
      %401 = vmatpush1.bf16.msra.mxu0 0
      %402 = vmatprep.subr.bf16.mxu0 0
      %403 = vmatpush1.bf16.msra.mxu0 0
      %404 = vmatprep.subr.bf16.mxu0 0
      %405 = vmatpush1.bf16.msra.mxu0 0
      %406 = vmatprep.subr.bf16.mxu0 0
      %407 = vmatpush1.bf16.msra.mxu0 %v390
      %408 = vmatprep.subr.bf16.mxu0 0
      %409 = vmatpush2.bf16.msra.mxu0 0
      %410 = vmatprep.subr.bf16.mxu0 0
      %411 = vmatpush2.bf16.msra.mxu0 0
      %412 = vmatprep.subr.bf16.mxu0 0
      %413 = vmatpush2.bf16.msra.mxu0 0
      %414 = vmatprep.subr.bf16.mxu0 0
      %415 = vmatpush2.bf16.msra.mxu0 0
      %416 = vmatprep.subr.bf16.mxu0 0
      %417 = vmatpush2.bf16.msra.mxu0 0
      %418 = vmatprep.subr.bf16.mxu0 0
      %419 = vmatpush2.bf16.msra.mxu0 0
      %420 = vmatprep.subr.bf16.mxu0 0
      %421 = vmatpush2.bf16.msra.mxu0 0
      %422 = vmatprep.subr.bf16.mxu0 0
      %423 = vmatpush2.bf16.msra.mxu0 0
      %424 = vmatprep.mubr.bf16.mxu0 0
      %425 = vmatmul.mubr.bf16.gmra.mxu0 %v384
      %v426 = vpop.f32.mrf.mxu0
      %v427 = vadd.f32 0.0, %v426
      %v428 = vpop.f32.mrf.mxu0
      %v429 = vpop.f32.mrf.mxu0
      %v430 = vadd.f32 0.0, %v429
      %v431 = vpop.f32.mrf.mxu0
      %432 = vmatprep.mubr.bf16.mxu0 0
      %433 = vmatmul.mubr.bf16.gmra.mxu0 %v387
      %v434 = vpop.f32.mrf.mxu0
      %v435 = vadd.f32 0.0, %v434
      %v436 = vpop.f32.mrf.mxu0
      %v437 = vpop.f32.mrf.mxu0
      %v438 = vpop.f32.mrf.mxu0
      %439 = vdwg.mxu0
      %v440 = vadd.f32 %v363, %v427
      %v441 = vadd.f32 %v364, %v430
      %v442 = vadd.f32 %v365, %v435
      %443 = vst.msk [vmem:[#allocation2] sm:$0xff] %vm358, %v440
      %444 = vst.msk [vmem:[#allocation2 + $0x8] sm:$0xff] %vm358, %v441
      %445 = vst.msk [vmem:[#allocation2 + $0x10] sm:$0x3] %vm361, %v442
      %v446 = vld [vmem:[#allocation2] sm:$0xff]
      %v447 = vld [vmem:[#allocation2 + $0x8] sm:$0xff]
      %v448 = vld [vmem:[#allocation2 + $0x10] sm:$0x3]
      %v449 = vld [vmem:[%s273] sm:$0xc]
      %v450 = vld [vmem:[%s273 + $0x4] sm:$0xf]
      %v451 = vld [vmem:[%s273 + $0x8] sm:$0x7]
      %s452 = scalar_lea.vmem %s1, 4
      %v453 = vld [vmem:[%s452] sm:$0x3]
      %v457 = vunpack.c.l.b16 %v449
      %v458 = vunpack.c.l.b16 %v450
      %v459 = vunpack.c.l.b16 %v451
      %v460 = vpack.c.b16 %v458, %v457
      %v461 = vpack.c.b16 %v459, %v459
      %vm462 = vcmask 1045504
      %v463 = vrot.slane %v460, 2
      %v464 = vrot.slane %v461, 2
      %v465 = vsel %vm462, %v463, %v464
      %v467 = vsel %vm299, %v465, 0
      %v470 = vsel %vm299, %v464, 0
      %v473 = vsel %vm306, %v453, 0
      %475 = vmatprep.subr.bf16.mxu0 0
      %476 = vmatpush1.bf16.msra.mxu0 0
      %477 = vmatprep.subr.bf16.mxu0 0
      %478 = vmatpush1.bf16.msra.mxu0 0
      %479 = vmatprep.subr.bf16.mxu0 0
      %480 = vmatpush1.bf16.msra.mxu0 0
      %481 = vmatprep.subr.bf16.mxu0 0
      %482 = vmatpush1.bf16.msra.mxu0 0
      %483 = vmatprep.subr.bf16.mxu0 0
      %484 = vmatpush1.bf16.msra.mxu0 0
      %485 = vmatprep.subr.bf16.mxu0 0
      %486 = vmatpush1.bf16.msra.mxu0 0
      %487 = vmatprep.subr.bf16.mxu0 0
      %488 = vmatpush1.bf16.msra.mxu0 0
      %489 = vmatprep.subr.bf16.mxu0 0
      %490 = vmatpush1.bf16.msra.mxu0 %v473
      %491 = vmatprep.subr.bf16.mxu0 0
      %492 = vmatpush2.bf16.msra.mxu0 0
      %493 = vmatprep.subr.bf16.mxu0 0
      %494 = vmatpush2.bf16.msra.mxu0 0
      %495 = vmatprep.subr.bf16.mxu0 0
      %496 = vmatpush2.bf16.msra.mxu0 0
      %497 = vmatprep.subr.bf16.mxu0 0
      %498 = vmatpush2.bf16.msra.mxu0 0
      %499 = vmatprep.subr.bf16.mxu0 0
      %500 = vmatpush2.bf16.msra.mxu0 0
      %501 = vmatprep.subr.bf16.mxu0 0
      %502 = vmatpush2.bf16.msra.mxu0 0
      %503 = vmatprep.subr.bf16.mxu0 0
      %504 = vmatpush2.bf16.msra.mxu0 0
      %505 = vmatprep.subr.bf16.mxu0 0
      %506 = vmatpush2.bf16.msra.mxu0 0
      %507 = vmatprep.mubr.bf16.mxu0 0
      %508 = vmatmul.mubr.bf16.gmra.mxu0 %v467
      %v509 = vpop.f32.mrf.mxu0
      %v510 = vadd.f32 0.0, %v509
      %v511 = vpop.f32.mrf.mxu0
      %v512 = vpop.f32.mrf.mxu0
      %v513 = vadd.f32 0.0, %v512
      %v514 = vpop.f32.mrf.mxu0
      %515 = vmatprep.mubr.bf16.mxu0 0
      %516 = vmatmul.mubr.bf16.gmra.mxu0 %v470
      %v517 = vpop.f32.mrf.mxu0
      %v518 = vadd.f32 0.0, %v517
      %v519 = vpop.f32.mrf.mxu0
      %v520 = vpop.f32.mrf.mxu0
      %v521 = vpop.f32.mrf.mxu0
      %522 = vdwg.mxu0
      %v523 = vadd.f32 %v446, %v510
      %v524 = vadd.f32 %v447, %v513
      %v525 = vadd.f32 %v448, %v518
      %526 = vst.msk [vmem:[#allocation2] sm:$0xff] %vm358, %v523
      %527 = vst.msk [vmem:[#allocation2 + $0x8] sm:$0xff] %vm358, %v524
      %528 = vst.msk [vmem:[#allocation2 + $0x10] sm:$0x3] %vm361, %v525
      %vm529 = vcmask 58368
      %vm530 = vsmask.f32 1280
      %vm531 = vmand %vm529, %vm530
      %v532 = vld [vmem:[#allocation3] sm:$0x3]
      %v533 = vsel %vm531, 0, %v532
      %534 = vst [vmem:[#allocation3] sm:$0x3] %v533
      %vm535 = vcmask 60418
      %vm536 = vsmask.f32 7946
      %vm537 = vmand %vm535, %vm536
      %v538 = vld [vmem:[#allocation3 + $0x8] sm:$0xc]
      %v539 = vsel %vm537, 0, %v538
      %540 = vst [vmem:[#allocation3 + $0x8] sm:$0xc] %v539
      %v541 = vld [vmem:[#allocation2] sm:$0xff]
      %v542 = vld [vmem:[#allocation2 + $0x8] sm:$0xff]
      %v543 = vld [vmem:[#allocation2 + $0x10] sm:$0x3]
      %v544 = vmax.f32 %v541, 0.0
      %v545 = vmax.f32 %v542, 0.0
      %v546 = vmax.f32 %v543, 0.0
      %v547 = vpack.c.bf16 %v545, %v544
      %v548 = vpack.c.bf16 %v546, %v546
      %v551 = vunpack.c.l.b16 %v547
      %v552 = vunpack.c.h.b16 %v547
      %v553 = vunpack.c.l.b16 %v548
      %v554 = vpack.c.b16 %v551, %v551
      %v555 = vpack.c.b16 %v552, %v552
      %v556 = vpack.c.b16 %v553, %v553
      %vm557 = vsmask.f32 5392
      %vm558 = vmor %vm530, %vm557
      %v560 = vshrl.u32 %v554, 16
      %v562 = vrot.slane %v560, 6
      %v563 = vshll.u32 %v554, 16
      %v565 = vrot.slane %v563, 7
      %v566 = vor.u32 %v562, %v565
      %v567 = vrot.slane %v566, 4
      %v569 = vshrl.u32 %v555, 16
      %v571 = vrot.slane %v569, 6
      %v572 = vshll.u32 %v555, 16
      %v574 = vrot.slane %v572, 7
      %v575 = vor.u32 %v571, %v574
      %v576 = vsel %vm558, %v567, %v575
      %v577 = vrot.slane %v575, 4
      %v579 = vshrl.u32 %v556, 16
      %v581 = vrot.slane %v579, 6
      %v582 = vshll.u32 %v556, 16
      %v584 = vrot.slane %v582, 7
      %v585 = vor.u32 %v581, %v584
      %v586 = vsel %vm558, %v577, %v585
      %vm590 = vcmask 60417
      %vm591 = vsmask.f32 7942
      %vm592 = vmand %vm590, %vm591
      %v593 = vld [vmem:[#allocation3] sm:$0xe]
      %v594 = vsel %vm592, %v566, %v593
      %595 = vst [vmem:[#allocation3] sm:$0xe] %v594
      %vm596 = vcmask 60416
      %597 = vst.msk [vmem:[#allocation3 + $0x4] sm:$0xf] %vm596, %v576
      %vm598 = vcmask 59392
      %vm599 = vsmask.f32 2304
      %vm600 = vmand %vm598, %vm599
      %v601 = vld [vmem:[#allocation3 + $0x8] sm:$0x7]
      %v602 = vsel %vm600, %v586, %v601
      %603 = vst [vmem:[#allocation3 + $0x8] sm:$0x7] %v602
      %v604 = vld [vmem:[#allocation3] sm:$0xf]
      %v605 = vld [vmem:[#allocation3 + $0x4] sm:$0xf]
      %v606 = vld [vmem:[#allocation3 + $0x8] sm:$0x3]
      %v607 = vld [vmem:[%s3] sm:$0xf]
      %v608 = vld [vmem:[%s4] sm:$0x1]
      %v610 = vlaneseq
      %v611 = vshrl.u32 %v610, 7
      %v612 = vsub.s32 0, %v611
      %v613 = vrot.slane %v608, %v612
      %v618 = vunpack.c.l.b16 %v604
      %v619 = vunpack.c.l.b16 %v605
      %v620 = vunpack.c.l.b16 %v606
      %v621 = vpack.c.b16 %v619, %v618
      %v622 = vpack.c.b16 %v620, %v620
      %v624 = vsel %vm358, %v621, 0
      %v627 = vsel %vm358, %v622, 0
      %vm629 = vcmask 1043456
      %v631 = vsel %vm629, %v607, 0
      %633 = vmatprep.subr.bf16.mxu0 0
      %634 = vmatpush1.bf16.msra.mxu0 0
      %635 = vmatprep.subr.bf16.mxu0 0
      %636 = vmatpush1.bf16.msra.mxu0 0
      %637 = vmatprep.subr.bf16.mxu0 0
      %638 = vmatpush1.bf16.msra.mxu0 0
      %639 = vmatprep.subr.bf16.mxu0 0
      %640 = vmatpush1.bf16.msra.mxu0 0
      %641 = vmatprep.subr.bf16.mxu0 0
      %642 = vmatpush1.bf16.msra.mxu0 0
      %643 = vmatprep.subr.bf16.mxu0 0
      %644 = vmatpush1.bf16.msra.mxu0 0
      %645 = vmatprep.subr.bf16.mxu0 0
      %646 = vmatpush1.bf16.msra.mxu0 0
      %647 = vmatprep.subr.bf16.mxu0 0
      %648 = vmatpush1.bf16.msra.mxu0 %v631
      %649 = vmatprep.subr.bf16.mxu0 0
      %650 = vmatpush2.bf16.msra.mxu0 0
      %651 = vmatprep.subr.bf16.mxu0 0
      %652 = vmatpush2.bf16.msra.mxu0 0
      %653 = vmatprep.subr.bf16.mxu0 0
      %654 = vmatpush2.bf16.msra.mxu0 0
      %655 = vmatprep.subr.bf16.mxu0 0
      %656 = vmatpush2.bf16.msra.mxu0 0
      %657 = vmatprep.subr.bf16.mxu0 0
      %658 = vmatpush2.bf16.msra.mxu0 0
      %659 = vmatprep.subr.bf16.mxu0 0
      %660 = vmatpush2.bf16.msra.mxu0 0
      %661 = vmatprep.subr.bf16.mxu0 0
      %662 = vmatpush2.bf16.msra.mxu0 0
      %663 = vmatprep.subr.bf16.mxu0 0
      %664 = vmatpush2.bf16.msra.mxu0 0
      %665 = vmatprep.mubr.bf16.mxu0 0
      %666 = vmatmul.mubr.bf16.gmra.mxu0 %v624
      %v667 = vpop.f32.mrf.mxu0
      %v668 = vadd.f32 %v613, %v667
      %v669 = vpop.f32.mrf.mxu0
      %v670 = vpop.f32.mrf.mxu0
      %v671 = vadd.f32 %v613, %v670
      %v672 = vpop.f32.mrf.mxu0
      %673 = vmatprep.mubr.bf16.mxu0 0
      %674 = vmatmul.mubr.bf16.gmra.mxu0 %v627
      %v675 = vpop.f32.mrf.mxu0
      %v676 = vadd.f32 %v613, %v675
      %v677 = vpop.f32.mrf.mxu0
      %v678 = vpop.f32.mrf.mxu0
      %v679 = vpop.f32.mrf.mxu0
      %680 = vdwg.mxu0
      %681 = vst.msk [vmem:[#allocation2] sm:$0xff] %vm358, %v668
      %682 = vst.msk [vmem:[#allocation2 + $0x8] sm:$0xff] %vm358, %v671
      %683 = vst.msk [vmem:[#allocation2 + $0x10] sm:$0xf] %vm596, %v676
      %v684 = vld [vmem:[#allocation2] sm:$0xff]
      %v685 = vld [vmem:[#allocation2 + $0x8] sm:$0xff]
      %v686 = vld [vmem:[#allocation2 + $0x10] sm:$0xf]
      %v687 = vld [vmem:[#allocation3] sm:$0xe]
      %v688 = vld [vmem:[#allocation3 + $0x4] sm:$0xf]
      %v689 = vld [vmem:[#allocation3 + $0x8] sm:$0x7]
      %s690 = scalar_lea.vmem %s3, 4
      %v691 = vld [vmem:[%s690] sm:$0xf]
      %v695 = vunpack.c.l.b16 %v687
      %v696 = vunpack.c.l.b16 %v688
      %v697 = vunpack.c.l.b16 %v689
      %v698 = vpack.c.b16 %v696, %v695
      %v699 = vpack.c.b16 %v697, %v697
      %v700 = vrot.slane %v698, 1
      %v701 = vrot.slane %v699, 1
      %v702 = vsel %vm379, %v700, %v701
      %v704 = vsel %vm358, %v702, 0
      %v707 = vsel %vm358, %v701, 0
      %v710 = vsel %vm629, %v691, 0
      %712 = vmatprep.subr.bf16.mxu0 0
      %713 = vmatpush1.bf16.msra.mxu0 0
      %714 = vmatprep.subr.bf16.mxu0 0
      %715 = vmatpush1.bf16.msra.mxu0 0
      %716 = vmatprep.subr.bf16.mxu0 0
      %717 = vmatpush1.bf16.msra.mxu0 0
      %718 = vmatprep.subr.bf16.mxu0 0
      %719 = vmatpush1.bf16.msra.mxu0 0
      %720 = vmatprep.subr.bf16.mxu0 0
      %721 = vmatpush1.bf16.msra.mxu0 0
      %722 = vmatprep.subr.bf16.mxu0 0
      %723 = vmatpush1.bf16.msra.mxu0 0
      %724 = vmatprep.subr.bf16.mxu0 0
      %725 = vmatpush1.bf16.msra.mxu0 0
      %726 = vmatprep.subr.bf16.mxu0 0
      %727 = vmatpush1.bf16.msra.mxu0 %v710
      %728 = vmatprep.subr.bf16.mxu0 0
      %729 = vmatpush2.bf16.msra.mxu0 0
      %730 = vmatprep.subr.bf16.mxu0 0
      %731 = vmatpush2.bf16.msra.mxu0 0
      %732 = vmatprep.subr.bf16.mxu0 0
      %733 = vmatpush2.bf16.msra.mxu0 0
      %734 = vmatprep.subr.bf16.mxu0 0
      %735 = vmatpush2.bf16.msra.mxu0 0
      %736 = vmatprep.subr.bf16.mxu0 0
      %737 = vmatpush2.bf16.msra.mxu0 0
      %738 = vmatprep.subr.bf16.mxu0 0
      %739 = vmatpush2.bf16.msra.mxu0 0
      %740 = vmatprep.subr.bf16.mxu0 0
      %741 = vmatpush2.bf16.msra.mxu0 0
      %742 = vmatprep.subr.bf16.mxu0 0
      %743 = vmatpush2.bf16.msra.mxu0 0
      %744 = vmatprep.mubr.bf16.mxu0 0
      %745 = vmatmul.mubr.bf16.gmra.mxu0 %v704
      %v746 = vpop.f32.mrf.mxu0
      %v747 = vadd.f32 0.0, %v746
      %v748 = vpop.f32.mrf.mxu0
      %v749 = vpop.f32.mrf.mxu0
      %v750 = vadd.f32 0.0, %v749
      %v751 = vpop.f32.mrf.mxu0
      %752 = vmatprep.mubr.bf16.mxu0 0
      %753 = vmatmul.mubr.bf16.gmra.mxu0 %v707
      %v754 = vpop.f32.mrf.mxu0
      %v755 = vadd.f32 0.0, %v754
      %v756 = vpop.f32.mrf.mxu0
      %v757 = vpop.f32.mrf.mxu0
      %v758 = vpop.f32.mrf.mxu0
      %759 = vdwg.mxu0
      %v760 = vadd.f32 %v684, %v747
      %v761 = vadd.f32 %v685, %v750
      %v762 = vadd.f32 %v686, %v755
      %763 = vst.msk [vmem:[#allocation2] sm:$0xff] %vm358, %v760
      %764 = vst.msk [vmem:[#allocation2 + $0x8] sm:$0xff] %vm358, %v761
      %765 = vst.msk [vmem:[#allocation2 + $0x10] sm:$0xf] %vm596, %v762
      %v766 = vld [vmem:[#allocation2] sm:$0xff]
      %v767 = vld [vmem:[#allocation2 + $0x8] sm:$0xff]
      %v768 = vld [vmem:[#allocation2 + $0x10] sm:$0xf]
      %v769 = vld [vmem:[#allocation3] sm:$0xc]
      %v770 = vld [vmem:[#allocation3 + $0x4] sm:$0xf]
      %v771 = vld [vmem:[#allocation3 + $0x8] sm:$0xf]
      %s772 = scalar_lea.vmem %s3, 8
      %v773 = vld [vmem:[%s772] sm:$0xf]
      %v777 = vunpack.c.l.b16 %v769
      %v778 = vunpack.c.l.b16 %v770
      %v779 = vunpack.c.l.b16 %v771
      %v780 = vpack.c.b16 %v778, %v777
      %v781 = vpack.c.b16 %v779, %v779
      %v782 = vrot.slane %v780, 2
      %v783 = vrot.slane %v781, 2
      %v784 = vsel %vm462, %v782, %v783
      %v786 = vsel %vm358, %v784, 0
      %v789 = vsel %vm358, %v783, 0
      %v792 = vsel %vm629, %v773, 0
      %794 = vmatprep.subr.bf16.mxu0 0
      %795 = vmatpush1.bf16.msra.mxu0 0
      %796 = vmatprep.subr.bf16.mxu0 0
      %797 = vmatpush1.bf16.msra.mxu0 0
      %798 = vmatprep.subr.bf16.mxu0 0
      %799 = vmatpush1.bf16.msra.mxu0 0
      %800 = vmatprep.subr.bf16.mxu0 0
      %801 = vmatpush1.bf16.msra.mxu0 0
      %802 = vmatprep.subr.bf16.mxu0 0
      %803 = vmatpush1.bf16.msra.mxu0 0
      %804 = vmatprep.subr.bf16.mxu0 0
      %805 = vmatpush1.bf16.msra.mxu0 0
      %806 = vmatprep.subr.bf16.mxu0 0
      %807 = vmatpush1.bf16.msra.mxu0 0
      %808 = vmatprep.subr.bf16.mxu0 0
      %809 = vmatpush1.bf16.msra.mxu0 %v792
      %810 = vmatprep.subr.bf16.mxu0 0
      %811 = vmatpush2.bf16.msra.mxu0 0
      %812 = vmatprep.subr.bf16.mxu0 0
      %813 = vmatpush2.bf16.msra.mxu0 0
      %814 = vmatprep.subr.bf16.mxu0 0
      %815 = vmatpush2.bf16.msra.mxu0 0
      %816 = vmatprep.subr.bf16.mxu0 0
      %817 = vmatpush2.bf16.msra.mxu0 0
      %818 = vmatprep.subr.bf16.mxu0 0
      %819 = vmatpush2.bf16.msra.mxu0 0
      %820 = vmatprep.subr.bf16.mxu0 0
      %821 = vmatpush2.bf16.msra.mxu0 0
      %822 = vmatprep.subr.bf16.mxu0 0
      %823 = vmatpush2.bf16.msra.mxu0 0
      %824 = vmatprep.subr.bf16.mxu0 0
      %825 = vmatpush2.bf16.msra.mxu0 0
      %826 = vmatprep.mubr.bf16.mxu0 0
      %827 = vmatmul.mubr.bf16.gmra.mxu0 %v786
      %v828 = vpop.f32.mrf.mxu0
      %v829 = vadd.f32 0.0, %v828
      %v830 = vpop.f32.mrf.mxu0
      %v831 = vpop.f32.mrf.mxu0
      %v832 = vadd.f32 0.0, %v831
      %v833 = vpop.f32.mrf.mxu0
      %834 = vmatprep.mubr.bf16.mxu0 0
      %835 = vmatmul.mubr.bf16.gmra.mxu0 %v789
      %v836 = vpop.f32.mrf.mxu0
      %v837 = vadd.f32 0.0, %v836
      %v838 = vpop.f32.mrf.mxu0
      %v839 = vpop.f32.mrf.mxu0
      %v840 = vpop.f32.mrf.mxu0
      %841 = vdwg.mxu0
      %v842 = vadd.f32 %v766, %v829
      %v843 = vadd.f32 %v767, %v832
      %v844 = vadd.f32 %v768, %v837
      %845 = vst.msk [vmem:[#allocation2] sm:$0xff] %vm358, %v842
      %846 = vst.msk [vmem:[#allocation2 + $0x8] sm:$0xff] %vm358, %v843
      %847 = vst.msk [vmem:[#allocation2 + $0x10] sm:$0xf] %vm596, %v844
      %v848 = vld [vmem:[%s273] sm:$0xe]
      %v849 = vld [vmem:[%s273 + $0x4] sm:$0xf]
      %v850 = vld [vmem:[%s273 + $0x8] sm:$0x3]
      %v851 = vld [vmem:[%s5] sm:$0x3]
      %v852 = vld [vmem:[%s6] sm:$0x1]
      %v854 = vlaneseq
      %v855 = vshrl.u32 %v854, 7
      %v856 = vsub.s32 0, %v855
      %v857 = vrot.slane %v852, %v856
      %v862 = vunpack.c.l.b16 %v848
      %v863 = vunpack.c.l.b16 %v849
      %v864 = vunpack.c.l.b16 %v850
      %v865 = vpack.c.b16 %v863, %v862
      %v866 = vpack.c.b16 %v864, %v864
      %vm867 = vsmask.f32 6400
      %v869 = vshrl.u32 %v865, 16
      %v871 = vrot.slane %v869, 1
      %v872 = vshll.u32 %v865, 16
      %v874 = vrot.slane %v872, 2
      %v875 = vor.u32 %v871, %v874
      %v877 = vshrl.u32 %v866, 16
      %v879 = vrot.slane %v877, 1
      %v880 = vshll.u32 %v866, 16
      %v882 = vrot.slane %v880, 2
      %v883 = vor.u32 %v879, %v882
      %v884 = vsel %vm867, %v875, %v883
      %v886 = vsel %vm299, %v884, 0
      %v889 = vsel %vm306, %v851, 0
      %891 = vmatprep.subr.bf16.mxu0 0
      %892 = vmatpush1.bf16.msra.mxu0 0
      %893 = vmatprep.subr.bf16.mxu0 0
      %894 = vmatpush1.bf16.msra.mxu0 0
      %895 = vmatprep.subr.bf16.mxu0 0
      %896 = vmatpush1.bf16.msra.mxu0 0
      %897 = vmatprep.subr.bf16.mxu0 0
      %898 = vmatpush1.bf16.msra.mxu0 0
      %899 = vmatprep.subr.bf16.mxu0 0
      %900 = vmatpush1.bf16.msra.mxu0 0
      %901 = vmatprep.subr.bf16.mxu0 0
      %902 = vmatpush1.bf16.msra.mxu0 0
      %903 = vmatprep.subr.bf16.mxu0 0
      %904 = vmatpush1.bf16.msra.mxu0 0
      %905 = vmatprep.subr.bf16.mxu0 0
      %906 = vmatpush1.bf16.msra.mxu0 %v889
      %907 = vmatprep.subr.bf16.mxu0 0
      %908 = vmatpush2.bf16.msra.mxu0 0
      %909 = vmatprep.subr.bf16.mxu0 0
      %910 = vmatpush2.bf16.msra.mxu0 0
      %911 = vmatprep.subr.bf16.mxu0 0
      %912 = vmatpush2.bf16.msra.mxu0 0
      %913 = vmatprep.subr.bf16.mxu0 0
      %914 = vmatpush2.bf16.msra.mxu0 0
      %915 = vmatprep.subr.bf16.mxu0 0
      %916 = vmatpush2.bf16.msra.mxu0 0
      %917 = vmatprep.subr.bf16.mxu0 0
      %918 = vmatpush2.bf16.msra.mxu0 0
      %919 = vmatprep.subr.bf16.mxu0 0
      %920 = vmatpush2.bf16.msra.mxu0 0
      %921 = vmatprep.subr.bf16.mxu0 0
      %922 = vmatpush2.bf16.msra.mxu0 0
      %923 = vmatprep.mubr.bf16.mxu0 0
      %924 = vmatmul.mubr.bf16.gmra.mxu0 %v886
      %v925 = vpop.f32.mrf.mxu0
      %v926 = vadd.f32 %v857, %v925
      %v927 = vpop.f32.mrf.mxu0
      %v928 = vpop.f32.mrf.mxu0
      %v929 = vadd.f32 %v857, %v928
      %v930 = vpop.f32.mrf.mxu0
      %931 = vdwg.mxu0
      %v932 = vld [vmem:[#allocation2] sm:$0xff]
      %v933 = vld [vmem:[#allocation2 + $0x8] sm:$0xff]
      %v934 = vmax.f32 %v932, 0.0
      %v935 = vmax.f32 %v933, 0.0
      %v936 = vadd.f32 %v934, %v926
      %v937 = vadd.f32 %v935, %v929
      %v938 = vmax.f32 %v936, 0.0
      %v939 = vmax.f32 %v937, 0.0
      %v940 = vpack.c.bf16 %v939, %v938
      %v942 = vunpack.c.l.b16 %v940
      %v943 = vunpack.c.h.b16 %v940
      %v944 = vpack.c.b16 %v942, %v942
      %v945 = vpack.c.b16 %v943, %v943
      %948 = vst.msk [vmem:[%s278] sm:$0xf] %vm596, %v944
      %949 = vst.msk [vmem:[%s278 + $0x4] sm:$0xf] %vm596, %v945
      %p950 = scmp.lt.s32.totalorder %s18, 1
      %s951 = scalar_select %p950, %s18, 1
      %s952 = smul.addr %s951, 2
      %s953 = smul.addr %s952, 4
      %s954 = scalar_lea.vmem %s7, %s953
      // Predicated region
      $region49: #{tpu_custom_call.1} parent=47 // pred_check
        %p955 = pneg %p188
      $region50: #{tpu_custom_call.1} parent=47 // pred_check_branch
        %957 = sbr.rel (%p955) target = $region52
      $region51: #{tpu_custom_call.1} parent=47 // pred_region
        _
      $region52: #{tpu_custom_call.1} parent=47 // pred_fallthru
        _
    $region48: #{tpu_custom_call.1} parent=5 // pred_fallthru
      _
    %p958 = scmp.le.s32.totalorder 2, %s13
    // Predicated region
    $region53: #{tpu_custom_call.1} parent=5 // pred_check
      %p959 = pneg %p958
    $region54: #{tpu_custom_call.1} parent=5 // pred_check_branch
      %961 = sbr.rel (%p959) target = $region56
    $region55: #{tpu_custom_call.1} parent=5 // pred_region
      %s962 = ssub.s32 %s13, 2
      // Predicated region
      $region57: #{tpu_custom_call.1} parent=55 // pred_check
        %p963 = pneg %p194
      $region58: #{tpu_custom_call.1} parent=55 // pred_check_branch
        %965 = sbr.rel (%p963) target = $region60
      $region59: #{tpu_custom_call.1} parent=55 // pred_region
        %p966 = scmp.lt.s32.totalorder %s19, 1
        %s967 = scalar_select %p966, %s19, 1
        %s968 = smul.addr %s967, 2
        %s969 = smul.addr %s968, 4
        %s970 = scalar_lea.vmem %s7, %s969
      $region60: #{tpu_custom_call.1} parent=55 // pred_fallthru
        _
    $region56: #{tpu_custom_call.1} parent=5 // pred_fallthru
      _
  $region6: #{tpu_custom_call.1} parent=0 // loop_footer
    %s17 = sadd.s32 1, %s13
  $region7: #{tpu_custom_call.1} parent=0 // loop_footer_branch
    %12 = sbr.rel target = $region3
  $region8: #{tpu_custom_call.1} parent=0 // loop_exit
    _

</llo_original>
